<compile_context>
chip_gen: v5e
topology: v5e:2x2
jax: 0.10.0
libtpu: 0.0.40
codegen_flags: <defaults>
</compile_context>

<pallas_src>
import jax
import jax.numpy as jnp
import numpy as np
from jax.experimental import pallas as pl
from jax.experimental.pallas import tpu as pltpu


def attention_kernel(enc_ref, dec_ref, mask_ref, cov_lane_ref, cov_col_ref,
                     wh_ref, wc_ref, v_ref,
                     ctx_ref, aw_ref, cov_out_ref):
    """One grid step processes a tile of Bt batch rows.

    Block shapes:
      enc_ref      : (Bt, L, D)  encoder outputs
      dec_ref      : (Bt, 1, D)  Ws(s_t) + b, precomputed outside (hoisted)
      mask_ref     : (Bt, 1, L)  padding masks, lane-dense (L on lanes)
      cov_lane_ref : (Bt, 1, L)  coverage, lane-dense (for the output add)
      cov_col_ref  : (Bt, L, 1)  coverage, column form (for the feature map)
      wh_ref       : (D, D)      Wh^T so that enc @ wh == Wh(enc) in torch
      wc_ref       : (1, D)      wc weight row (Linear(1, D))
      v_ref        : (1, D)      v weight row  (Linear(D, 1))
      ctx_ref      : (Bt, 1, D)  context vectors
      aw_ref       : (Bt, 1, L)  attention weights (lane-dense store)
      cov_out_ref  : (Bt, 1, L)  updated coverage  (lane-dense store)
    """
    Bt, L, D = enc_ref.shape

    enc3 = enc_ref[...]                                       # (Bt, L, D)

    # Batch-folded encoder projection on the MXU: single (Bt*L, D) @ (D, D).
    enc2 = enc3.reshape(Bt * L, D)
    enc_feat = jnp.dot(enc2, wh_ref[...],
                       preferred_element_type=jnp.float32).reshape(Bt, L, D)

    dec_feat = dec_ref[...]                                   # (Bt, 1, D), hoisted Ws(s_t)
    cov_feat = cov_col_ref[...] * wc_ref[...][None]           # (Bt,L,1)*(1,1,D)->(Bt,L,D)

    att = jnp.tanh(enc_feat + dec_feat + cov_feat)            # (Bt, L, D) f32

    # Lane-dense score: (Bt,1,D) x (Bt,L,D) -> (Bt,1,L); L stays on lanes for the
    # whole softmax/mask/coverage path.
    v3 = jnp.broadcast_to(v_ref[...][None], (Bt, 1, D)).astype(jnp.float32)
    score = jnp.einsum('bqd,bkd->bqk', v3, att,
                       preferred_element_type=jnp.float32)    # (Bt, 1, L)

    mask = mask_ref[...]                                      # (Bt, 1, L)
    cov = cov_lane_ref[...]                                   # (Bt, 1, L)

    # Fused masked softmax: softmax + mask + renormalization collapse into a
    # single normalization (the softmax divide cancels in the masked renorm).
    m = jnp.max(score, axis=-1, keepdims=True)                # (Bt, 1, 1)
    e = jnp.exp(score - m) * mask
    denom = jnp.maximum(jnp.sum(e, axis=-1, keepdims=True), 1e-30)  # all-masked guard
    # pl.reciprocal(..., approx=True) would push this to the EUP slot if ~1e-4
    # relative error on the attention weights is acceptable.
    aw = e * pl.reciprocal(denom, approx=False)               # (Bt, 1, L)

    # Context on the MXU: (Bt,1,L) x (Bt,L,D) -> (Bt,1,D).
    ctx = jnp.einsum('bqk,bkd->bqd', aw.astype(enc3.dtype), enc3,
                     preferred_element_type=jnp.float32)      # (Bt, 1, D)

    ctx_ref[...] = ctx.astype(ctx_ref.dtype)
    aw_ref[...] = aw.astype(aw_ref.dtype)
    cov_out_ref[...] = (cov + aw).astype(cov_out_ref.dtype)


def attention_forward(decoder_h, decoder_c, encoder_output, x_padding_masks,
                      coverage_vector, params, *, block_b=None, matmul_dtype=None):
    """JAX wrapper matching the PyTorch forward semantics (coverage=True)."""
    B, L, D = encoder_output.shape

    # s_t = cat([h, c], dim=2).transpose(0, 1) -> (B, 1, D)
    s_t = jnp.transpose(jnp.concatenate([decoder_h, decoder_c], axis=2), (1, 0, 2))

    # Hoisted decoder projection: one batched XLA matmul instead of a degenerate
    # M=1 matmul (and a second DxD weight DMA) inside the kernel.
    dec_feat = (s_t @ params["Ws_w"].T + params["Ws_b"]).astype(jnp.float32)  # (B,1,D)

    mask_lane = x_padding_masks[:, None, :].astype(jnp.float32)   # (B, 1, L) lane-dense
    cov_lane = coverage_vector[:, None, :].astype(jnp.float32)    # (B, 1, L) lane-dense
    cov_col = coverage_vector[:, :, None].astype(jnp.float32)     # (B, L, 1) column form

    wh_t = params["Wh_w"].T.astype(jnp.float32)                   # (D, D): enc @ Wh^T
    wc_row = params["wc_w"].T.astype(jnp.float32)                 # (1, D)
    v_row = params["v_w"].astype(jnp.float32)                     # (1, D)

    enc = encoder_output
    if matmul_dtype is not None:          # optional bf16 MXU inputs (v6e / v7x)
        enc = enc.astype(matmul_dtype)
        wh_t = wh_t.astype(matmul_dtype)

    # Fold the batch into each block, but keep >= 2 grid steps when B >= 2 so
    # both v7x TensorCores get work (dimension_semantics=("parallel",)).
    if block_b is None:
        block_b = B if B < 2 else B // 2
    block_b = max(1, min(block_b, B))
    while B % block_b != 0:
        block_b -= 1
    num_blocks = B // block_b
    # Per-block VMEM is tiny at these shapes (block_b*L*D f32 + D*D weights);
    # for large L on v7x (64 MiB VMEM) shrink block_b or raise vmem_limit_bytes.

    ctx, aw, cov_out = pl.pallas_call(
        attention_kernel,
        out_shape=(
            jax.ShapeDtypeStruct((B, 1, D), jnp.float32),
            jax.ShapeDtypeStruct((B, 1, L), jnp.float32),
            jax.ShapeDtypeStruct((B, 1, L), jnp.float32),
        ),
        grid_spec=pltpu.PrefetchScalarGridSpec(
            num_scalar_prefetch=0,
            grid=(num_blocks,),
            in_specs=[
                pl.BlockSpec((block_b, L, D), lambda i: (i, 0, 0)),   # encoder_output
                pl.BlockSpec((block_b, 1, D), lambda i: (i, 0, 0)),   # Ws(s_t)+b
                pl.BlockSpec((block_b, 1, L), lambda i: (i, 0, 0)),   # padding mask
                pl.BlockSpec((block_b, 1, L), lambda i: (i, 0, 0)),   # coverage (lane)
                pl.BlockSpec((block_b, L, 1), lambda i: (i, 0, 0)),   # coverage (column)
                pl.BlockSpec((D, D), lambda i: (0, 0)),               # Wh^T
                pl.BlockSpec((1, D), lambda i: (0, 0)),               # wc row
                pl.BlockSpec((1, D), lambda i: (0, 0)),               # v row
            ],
            out_specs=[
                pl.BlockSpec((block_b, 1, D), lambda i: (i, 0, 0)),   # context
                pl.BlockSpec((block_b, 1, L), lambda i: (i, 0, 0)),   # attention weights
                pl.BlockSpec((block_b, 1, L), lambda i: (i, 0, 0)),   # new coverage
            ],
        ),
        compiler_params=pltpu.CompilerParams(
            dimension_semantics=("parallel",)),
    )(enc, dec_feat, mask_lane, cov_lane, cov_col, wh_t, wc_row, v_row)

    # Only free unit-dim squeezes below (no data slicing / copies).
    return ctx[:, 0, :], aw[:, 0, :], cov_out[:, 0, :]


def attention_reference(decoder_h, decoder_c, encoder_output, x_padding_masks,
                        coverage_vector, params):
    """Pure-JAX reference mirroring the PyTorch code (coverage=True)."""
    s_t = jnp.concatenate([decoder_h, decoder_c], axis=2)         # (1, B, D)
    s_t = jnp.transpose(s_t, (1, 0, 2))                           # (B, 1, D)
    s_t = jnp.broadcast_to(s_t, encoder_output.shape)             # (B, L, D)

    enc_feat = encoder_output @ params["Wh_w"].T
    dec_feat = s_t @ params["Ws_w"].T + params["Ws_b"]
    cov_feat = coverage_vector[:, :, None] @ params["wc_w"].T      # (B, L, D)
    att_inputs = enc_feat + dec_feat + cov_feat
    score = jnp.tanh(att_inputs) @ params["v_w"].T                 # (B, L, 1)
    aw = jax.nn.softmax(score, axis=1)[:, :, 0]                    # (B, L)
    aw = aw * x_padding_masks
    aw = aw / jnp.sum(aw, axis=1, keepdims=True)
    context = jnp.einsum("bl,bld->bd", aw, encoder_output)
    new_cov = coverage_vector + aw
    return context, aw, new_cov


if __name__ == "__main__":
    hidden_units = 16
    D = 2 * hidden_units   # 32
    B, L = 4, 8

    key = jax.random.PRNGKey(0)
    keys = jax.random.split(key, 10)

    params = {
        "Wh_w": jax.random.normal(keys[0], (D, D), jnp.float32) * 0.1,
        "Ws_w": jax.random.normal(keys[1], (D, D), jnp.float32) * 0.1,
        "Ws_b": jax.random.normal(keys[2], (D,), jnp.float32) * 0.1,
        "wc_w": jax.random.normal(keys[3], (D, 1), jnp.float32) * 0.1,
        "v_w": jax.random.normal(keys[4], (1, D), jnp.float32) * 0.1,
    }

    decoder_h = jax.random.normal(keys[5], (1, B, hidden_units), jnp.float32)
    decoder_c = jax.random.normal(keys[6], (1, B, hidden_units), jnp.float32)
    encoder_output = jax.random.normal(keys[7], (B, L, D), jnp.float32)
    # non-trivial padding masks (trailing positions of rows 1 and 3 are padding)
    x_padding_masks = (jnp.ones((B, L), jnp.float32)
                       .at[1, -2:].set(0.0)
                       .at[3, -3:].set(0.0))
    coverage_vector = jax.nn.relu(
        jax.random.normal(keys[8], (B, L), jnp.float32)) * 0.1

    ctx, aw, cov = attention_forward(decoder_h, decoder_c, encoder_output,
                                     x_padding_masks, coverage_vector, params)
    jax.block_until_ready((ctx, aw, cov))

    ctx_r, aw_r, cov_r = attention_reference(decoder_h, decoder_c, encoder_output,
                                             x_padding_masks, coverage_vector, params)
    np.testing.assert_allclose(np.asarray(ctx), np.asarray(ctx_r), rtol=1e-3, atol=1e-3)
    np.testing.assert_allclose(np.asarray(aw), np.asarray(aw_r), rtol=1e-3, atol=1e-3)
    np.testing.assert_allclose(np.asarray(cov), np.asarray(cov_r), rtol=1e-3, atol=1e-3)

    assert ctx.shape == (B, D) and aw.shape == (B, L) and cov.shape == (B, L)
    print("KERNEL_OK")
</pallas_src>

<mosaic_0001>
module attributes {stable_mosaic.version = 11 : i64} {
  func.func @attention_kernel(%arg0: i32, %arg1: memref<2x8x32xf32, #tpu.memory_space<vmem>>, %arg2: memref<2x1x32xf32, #tpu.memory_space<vmem>>, %arg3: memref<2x1x8xf32, #tpu.memory_space<vmem>>, %arg4: memref<2x1x8xf32, #tpu.memory_space<vmem>>, %arg5: memref<2x8x1xf32, #tpu.memory_space<vmem>>, %arg6: memref<32x32xf32, #tpu.memory_space<vmem>>, %arg7: memref<1x32xf32, #tpu.memory_space<vmem>>, %arg8: memref<1x32xf32, #tpu.memory_space<vmem>>, %arg9: memref<2x1x32xf32, #tpu.memory_space<vmem>>, %arg10: memref<2x1x8xf32, #tpu.memory_space<vmem>>, %arg11: memref<2x1x8xf32, #tpu.memory_space<vmem>>) attributes {dimension_semantics = [#tpu.dimension_semantics<parallel>], iteration_bounds = array<i64: 2>, scalar_prefetch = 0 : i64, scratch_operands = 0 : i64, tpu.core_type = #tpu.core_type<tc>, window_params = [{transform_indices = @transform_0, window_bounds = array<i64: 2, 8, 32>}, {transform_indices = @transform_1, window_bounds = array<i64: 2, 1, 32>}, {transform_indices = @transform_2, window_bounds = array<i64: 2, 1, 8>}, {transform_indices = @transform_3, window_bounds = array<i64: 2, 1, 8>}, {transform_indices = @transform_4, window_bounds = array<i64: 2, 8, 1>}, {pipeline_mode = #tpu.pipeline_mode<synchronous>, transform_indices = @transform_5, window_bounds = array<i64: 32, 32>}, {pipeline_mode = #tpu.pipeline_mode<synchronous>, transform_indices = @transform_6, window_bounds = array<i64: 1, 32>}, {pipeline_mode = #tpu.pipeline_mode<synchronous>, transform_indices = @transform_7, window_bounds = array<i64: 1, 32>}, {transform_indices = @transform_8, window_bounds = array<i64: 2, 1, 32>}, {transform_indices = @transform_9, window_bounds = array<i64: 2, 1, 8>}, {transform_indices = @transform_10, window_bounds = array<i64: 2, 1, 8>}]} {
    %c0 = arith.constant 0 : index
    %c0_0 = arith.constant 0 : index
    %c0_1 = arith.constant 0 : index
    %0 = vector.load %arg1[%c0, %c0_0, %c0_1] : memref<2x8x32xf32, #tpu.memory_space<vmem>>, vector<2x8x32xf32>
    %1 = vector.shape_cast %0 : vector<2x8x32xf32> to vector<16x32xf32>
    %c0_2 = arith.constant 0 : index
    %c0_3 = arith.constant 0 : index
    %2 = vector.load %arg6[%c0_2, %c0_3] : memref<32x32xf32, #tpu.memory_space<vmem>>, vector<32x32xf32>
    %cst = arith.constant dense<0.000000e+00> : vector<16x32xf32>
    %3 = tpu.matmul %1, %2, %cst {dimension_numbers = #tpu.dot_dimension_numbers<[1], [0], [0], [1], [0, 0, 1, 1], [], []>} : vector<16x32xf32>, vector<32x32xf32>, vector<16x32xf32> -> vector<16x32xf32>
    %4 = vector.shape_cast %3 : vector<16x32xf32> to vector<2x8x32xf32>
    %c0_4 = arith.constant 0 : index
    %c0_5 = arith.constant 0 : index
    %c0_6 = arith.constant 0 : index
    %5 = vector.load %arg2[%c0_4, %c0_5, %c0_6] : memref<2x1x32xf32, #tpu.memory_space<vmem>>, vector<2x1x32xf32>
    %c0_7 = arith.constant 0 : index
    %c0_8 = arith.constant 0 : index
    %c0_9 = arith.constant 0 : index
    %6 = vector.load %arg5[%c0_7, %c0_8, %c0_9] : memref<2x8x1xf32, #tpu.memory_space<vmem>>, vector<2x8x1xf32>
    %c0_10 = arith.constant 0 : index
    %c0_11 = arith.constant 0 : index
    %7 = vector.load %arg7[%c0_10, %c0_11] : memref<1x32xf32, #tpu.memory_space<vmem>>, vector<1x32xf32>
    %8 = vector.shape_cast %7 : vector<1x32xf32> to vector<1x1x32xf32>
    %9 = vector.broadcast %6 : vector<2x8x1xf32> to vector<2x8x32xf32>
    %10 = vector.broadcast %8 : vector<1x1x32xf32> to vector<2x8x32xf32>
    %11 = arith.mulf %9, %10 : vector<2x8x32xf32>
    %12 = vector.broadcast %5 : vector<2x1x32xf32> to vector<2x8x32xf32>
    %13 = arith.addf %4, %12 : vector<2x8x32xf32>
    %14 = arith.addf %13, %11 : vector<2x8x32xf32>
    %15 = math.tanh %14 : vector<2x8x32xf32>
    %c0_12 = arith.constant 0 : index
    %c0_13 = arith.constant 0 : index
    %16 = vector.load %arg8[%c0_12, %c0_13] : memref<1x32xf32, #tpu.memory_space<vmem>>, vector<1x32xf32>
    %17 = vector.shape_cast %16 : vector<1x32xf32> to vector<1x1x32xf32>
    %18 = vector.shape_cast %17 : vector<1x1x32xf32> to vector<1x1x32xf32>
    %19 = vector.broadcast %18 : vector<1x1x32xf32> to vector<2x1x32xf32>
    "tpu.trace_start"() <{level = 10 : i32, message = "bqd,bkd->bqk"}> : () -> ()
    %cst_14 = arith.constant dense<0.000000e+00> : vector<2x1x8xf32>
    %20 = tpu.matmul %19, %15, %cst_14 {dimension_numbers = #tpu.dot_dimension_numbers<[2], [2], [1], [1], [0, 0, 0, 1, 1, 1], [0], [0]>} : vector<2x1x32xf32>, vector<2x8x32xf32>, vector<2x1x8xf32> -> vector<2x1x8xf32>
    "tpu.trace_stop"() : () -> ()
    %c0_15 = arith.constant 0 : index
    %c0_16 = arith.constant 0 : index
    %c0_17 = arith.constant 0 : index
    %21 = vector.load %arg3[%c0_15, %c0_16, %c0_17] : memref<2x1x8xf32, #tpu.memory_space<vmem>>, vector<2x1x8xf32>
    %c0_18 = arith.constant 0 : index
    %c0_19 = arith.constant 0 : index
    %c0_20 = arith.constant 0 : index
    %22 = vector.load %arg4[%c0_18, %c0_19, %c0_20] : memref<2x1x8xf32, #tpu.memory_space<vmem>>, vector<2x1x8xf32>
    %cst_21 = arith.constant dense<0xFF800000> : vector<2x1xf32>
    %23 = vector.multi_reduction <maximumf>, %20, %cst_21 [2] : vector<2x1x8xf32> to vector<2x1xf32>
    %24 = vector.shape_cast %23 : vector<2x1xf32> to vector<2x1x1xf32>
    %25 = vector.broadcast %24 : vector<2x1x1xf32> to vector<2x1x8xf32>
    %26 = arith.subf %20, %25 : vector<2x1x8xf32>
    %27 = math.exp %26 : vector<2x1x8xf32>
    %28 = arith.mulf %27, %21 : vector<2x1x8xf32>
    %cst_22 = arith.constant dense<0.000000e+00> : vector<2x1xf32>
    %29 = vector.multi_reduction <add>, %28, %cst_22 [2] : vector<2x1x8xf32> to vector<2x1xf32>
    %30 = vector.shape_cast %29 : vector<2x1xf32> to vector<2x1x1xf32>
    %cst_23 = arith.constant 1.000000e-30 : f32
    %31 = vector.broadcast %cst_23 : f32 to vector<2x1x1xf32>
    %32 = arith.maximumf %30, %31 : vector<2x1x1xf32>
    %33 = tpu.reciprocal %32 : vector<2x1x1xf32> -> vector<2x1x1xf32>
    %34 = vector.broadcast %33 : vector<2x1x1xf32> to vector<2x1x8xf32>
    %35 = arith.mulf %28, %34 : vector<2x1x8xf32>
    "tpu.trace_start"() <{level = 10 : i32, message = "bqk,bkd->bqd"}> : () -> ()
    %cst_24 = arith.constant dense<0.000000e+00> : vector<2x1x32xf32>
    %36 = tpu.matmul %35, %0, %cst_24 {dimension_numbers = #tpu.dot_dimension_numbers<[2], [1], [1], [2], [0, 0, 0, 1, 1, 2], [0], [0]>} : vector<2x1x8xf32>, vector<2x8x32xf32>, vector<2x1x32xf32> -> vector<2x1x32xf32>
    "tpu.trace_stop"() : () -> ()
    %c0_25 = arith.constant 0 : index
    %c0_26 = arith.constant 0 : index
    %c0_27 = arith.constant 0 : index
    %37 = vector.load %arg9[%c0_25, %c0_26, %c0_27] : memref<2x1x32xf32, #tpu.memory_space<vmem>>, vector<2x1x32xf32>
    tpu.vector_store %arg9[%c0_25, %c0_26, %c0_27], %36 {strides = array<i32>} : memref<2x1x32xf32, #tpu.memory_space<vmem>>, vector<2x1x32xf32>,
    %c0_28 = arith.constant 0 : index
    %c0_29 = arith.constant 0 : index
    %c0_30 = arith.constant 0 : index
    %38 = vector.load %arg10[%c0_28, %c0_29, %c0_30] : memref<2x1x8xf32, #tpu.memory_space<vmem>>, vector<2x1x8xf32>
    tpu.vector_store %arg10[%c0_28, %c0_29, %c0_30], %35 {strides = array<i32>} : memref<2x1x8xf32, #tpu.memory_space<vmem>>, vector<2x1x8xf32>,
    %39 = arith.addf %22, %35 : vector<2x1x8xf32>
    %c0_31 = arith.constant 0 : index
    %c0_32 = arith.constant 0 : index
    %c0_33 = arith.constant 0 : index
    %40 = vector.load %arg11[%c0_31, %c0_32, %c0_33] : memref<2x1x8xf32, #tpu.memory_space<vmem>>, vector<2x1x8xf32>
    tpu.vector_store %arg11[%c0_31, %c0_32, %c0_33], %39 {strides = array<i32>} : memref<2x1x8xf32, #tpu.memory_space<vmem>>, vector<2x1x8xf32>,
    return
  }
  func.func @transform_0(%arg0: i32) -> (i32, i32, i32) {
    %c0_i32 = arith.constant 0 : i32
    %c0_i32_0 = arith.constant 0 : i32
    %c0_i32_1 = arith.constant 0 : i32
    return %arg0, %c0_i32, %c0_i32_0 : i32, i32, i32
  }
  func.func @transform_1(%arg0: i32) -> (i32, i32, i32) {
    %c0_i32 = arith.constant 0 : i32
    %c0_i32_0 = arith.constant 0 : i32
    %c0_i32_1 = arith.constant 0 : i32
    return %arg0, %c0_i32, %c0_i32_0 : i32, i32, i32
  }
  func.func @transform_2(%arg0: i32) -> (i32, i32, i32) {
    %c0_i32 = arith.constant 0 : i32
    %c0_i32_0 = arith.constant 0 : i32
    %c0_i32_1 = arith.constant 0 : i32
    return %arg0, %c0_i32, %c0_i32_0 : i32, i32, i32
  }
  func.func @transform_3(%arg0: i32) -> (i32, i32, i32) {
    %c0_i32 = arith.constant 0 : i32
    %c0_i32_0 = arith.constant 0 : i32
    %c0_i32_1 = arith.constant 0 : i32
    return %arg0, %c0_i32, %c0_i32_0 : i32, i32, i32
  }
  func.func @transform_4(%arg0: i32) -> (i32, i32, i32) {
    %c0_i32 = arith.constant 0 : i32
    %c0_i32_0 = arith.constant 0 : i32
    %c0_i32_1 = arith.constant 0 : i32
    return %arg0, %c0_i32, %c0_i32_0 : i32, i32, i32
  }
  func.func @transform_5(%arg0: i32) -> (i32, i32) {
    %c0_i32 = arith.constant 0 : i32
    %c0_i32_0 = arith.constant 0 : i32
    %c0_i32_1 = arith.constant 0 : i32
    return %c0_i32, %c0_i32_0 : i32, i32
  }
  func.func @transform_6(%arg0: i32) -> (i32, i32) {
    %c0_i32 = arith.constant 0 : i32
    %c0_i32_0 = arith.constant 0 : i32
    %c0_i32_1 = arith.constant 0 : i32
    return %c0_i32, %c0_i32_0 : i32, i32
  }
  func.func @transform_7(%arg0: i32) -> (i32, i32) {
    %c0_i32 = arith.constant 0 : i32
    %c0_i32_0 = arith.constant 0 : i32
    %c0_i32_1 = arith.constant 0 : i32
    return %c0_i32, %c0_i32_0 : i32, i32
  }
  func.func @transform_8(%arg0: i32) -> (i32, i32, i32) {
    %c0_i32 = arith.constant 0 : i32
    %c0_i32_0 = arith.constant 0 : i32
    %c0_i32_1 = arith.constant 0 : i32
    return %arg0, %c0_i32, %c0_i32_0 : i32, i32, i32
  }
  func.func @transform_9(%arg0: i32) -> (i32, i32, i32) {
    %c0_i32 = arith.constant 0 : i32
    %c0_i32_0 = arith.constant 0 : i32
    %c0_i32_1 = arith.constant 0 : i32
    return %arg0, %c0_i32, %c0_i32_0 : i32, i32, i32
  }
  func.func @transform_10(%arg0: i32) -> (i32, i32, i32) {
    %c0_i32 = arith.constant 0 : i32
    %c0_i32_0 = arith.constant 0 : i32
    %c0_i32_1 = arith.constant 0 : i32
    return %arg0, %c0_i32, %c0_i32_0 : i32, i32, i32
  }
}

</mosaic_0001>

<llo_original>
// kernel: tpu_custom_call.1
$region0: #{tpu_custom_call.1}
  #allocation0 [shape = 'u32[]', space=smem, size = 0x4, offset = 0x4, fixed_abs, tag = 'smem constant byte address 0x4 - core index']
  #allocation1 [shape = 'u32[72,128]{1,0:T(1,128)}', space=vmem, size = 0x9000, scoped, tag = 'internal scratch']
  %s0 = inlined_call_operand.vmem [shape: f32[4,8,32], index: 0, kind: input, shape index: {}]
  %s1 = inlined_call_operand.vmem [shape: f32[4,1,32], index: 1, kind: input, shape index: {}]
  %s2 = inlined_call_operand.hbm [shape: f32[4,1,8], index: 2, kind: input, shape index: {}]
  %s3 = inlined_call_operand.hbm [shape: f32[4,1,8], index: 3, kind: input, shape index: {}]
  %s4 = inlined_call_operand.vmem [shape: f32[4,8,1], index: 4, kind: input, shape index: {}]
  %s5 = inlined_call_operand.hbm [shape: f32[32,32], index: 5, kind: input, shape index: {}]
  %s6 = inlined_call_operand.vmem [shape: f32[1,32], index: 6, kind: input, shape index: {}]
  %s7 = inlined_call_operand.vmem [shape: f32[1,32], index: 7, kind: input, shape index: {}]
  %s8 = inlined_call_operand.hbm [shape: f32[4,1,32], index: 8, kind: output, shape index: {0}]
  %s9 = inlined_call_operand.hbm [shape: f32[4,1,8], index: 9, kind: output, shape index: {1}]
  %s10 = inlined_call_operand.hbm [shape: f32[4,1,8], index: 10, kind: output, shape index: {2}]
  %11 = xla_tuple %s8, %s9, %s10
  %s12 = sld [smem:[#allocation0]]
  $region93: #{tpu_custom_call.1} parent=0
    _
  %s14 = ssub.s32 1, %s12
  %s15 = scalar_select 0, %s14, %s12
  $region1: #{tpu_custom_call.1} parent=0
    #allocation2 [shape = 'u8[2048]{0}', space=vmem, size = 0x800, scoped, tag = 'input window, operand 2']
    #allocation3 [shape = 's32[2]{0}', space=sflag, size = 0x8, scoped, tag = 'scoped memory for tpu_custom_call.1']
    #allocation4 [shape = 's32[2]{0}', space=sflag, size = 0x8, scoped, tag = 'scoped memory for tpu_custom_call.1']
    #allocation5 [shape = 'u8[2048]{0}', space=vmem, size = 0x800, scoped, tag = 'input window, operand 3']
    #allocation6 [shape = 's32[2]{0}', space=sflag, size = 0x8, scoped, tag = 'scoped memory for tpu_custom_call.1']
    #allocation7 [shape = 'u8[16384]{0}', space=vmem, size = 0x4000, scoped, tag = 'input window, operand 5, single buffered']
    #allocation8 [shape = 'u8[2048]{0}', space=vmem, size = 0x800, scoped, tag = 'output window, operand 0']
    #allocation9 [shape = 'u8[2048]{0}', space=vmem, size = 0x800, scoped, tag = 'output window, operand 1']
    #allocation10 [shape = 's32[2]{0}', space=sflag, size = 0x8, scoped, tag = 'scoped memory for tpu_custom_call.1']
    #allocation11 [shape = 'u8[2048]{0}', space=vmem, size = 0x800, scoped, tag = 'output window, operand 2']
    %16 = vsyncpa [#allocation3], 0
    %s17 = scalar_lea.sflag [#allocation3], 1
    %18 = vsyncpa %s17, 0
    %19 = vsyncpa [#allocation6], 0
    %s20 = scalar_lea.sflag [#allocation6], 1
    %21 = vsyncpa %s20, 0
    %22 = vsyncpa [#allocation4], 0
    %s23 = scalar_lea.sflag [#allocation4], 1
    %24 = vsyncpa %s23, 0
    %25 = vsyncpa [#allocation10], 0
    %s26 = scalar_lea.sflag [#allocation10], 1
    %27 = vsyncpa %s26, 0
    loop: start=0, step=1, limit=4
    $region2: #{tpu_custom_call.1} parent=1 // loop_pre_header
      _
    $region3: #{tpu_custom_call.1} parent=1 // loop_header
      %s29 = sphi 0, %s33
      %p30 = scmp.ge.s32.totalorder %s29, 4
      %s39 = sphi 0, %s41
      %s42 = sphi 0, %s39
      %s43 = sphi 0, %s42
      %s59 = sphi 0, %s43
      %s65 = sphi 0, %s67
      %s68 = sphi 0, %s65
      %s69 = sphi 0, %s68
      %s85 = sphi 0, %s69
      %s91 = sphi 0, %s93
      %s94 = sphi 0, %s91
      %s95 = sphi 0, %s94
      %s111 = sphi 0, %s95
      %s117 = sphi 0, %s119
      %s120 = sphi 0, %s117
      %s121 = sphi 0, %s120
      %s137 = sphi 0, %s121
      %s143 = sphi 0, %s145
      %s146 = sphi 0, %s143
      %s147 = sphi 0, %s146
      %s163 = sphi 0, %s147
      %s167 = sphi 0, %s167
      %s169 = sphi 0, %s167
      %s170 = sphi 0, %s169
      %s184 = sphi 0, %s170
      %s188 = sphi 0, %s188
      %s190 = sphi 0, %s188
      %s191 = sphi 0, %s190
      %s205 = sphi 0, %s191
      %s209 = sphi 0, %s209
      %s211 = sphi 0, %s209
      %s212 = sphi 0, %s211
      %s226 = sphi 0, %s212
      %s232 = sphi 0, %s234
      %s235 = sphi 0, %s232
      %s236 = sphi 0, %s235
      %s252 = sphi 0, %s236
      %s258 = sphi 0, %s260
      %s261 = sphi 0, %s258
      %s262 = sphi 0, %s261
      %s278 = sphi 0, %s262
      %s284 = sphi 0, %s286
      %s287 = sphi 0, %s284
      %s288 = sphi 0, %s287
      %s304 = sphi 0, %s288
    $region4: #{tpu_custom_call.1} parent=1 // loop_header_branch
      %32 = sbr.rel (%p30) target = $region8
    $region5: #{tpu_custom_call.1} parent=1 // loop_body
      %s34 = ssub.s32 %s29, 1
      %s35 = ssub.s32 %s29, 2
      %s36 = sadd.s32 %s29, 1
      %s37 = ssub.s32 %s29, %s36
      %p38 = scmp.eq.s32.totalorder %s37, 0
      %s40 = sadd.s32 %s39, 1
      %s41 = scalar_select %p38, %s39, %s40
      %p44 = pneg %p38
      %p45 = scmp.eq.s32.totalorder %s29, 1
      %p46 = por %p44, %p45
      %p47 = scmp.ne.s32.totalorder %s39, %s42
      %p48 = scmp.eq.s32.totalorder %s29, 0
      %p49 = por %p47, %p48
      %p50 = scmp.ne.s32.totalorder %s39, %s42
      %p51 = scmp.eq.s32.totalorder %s34, 1
      %p52 = por %p50, %p51
      %p53 = scmp.ne.s32.totalorder %s42, %s43
      %p54 = scmp.eq.s32.totalorder %s34, 0
      %p55 = por %p53, %p54
      %p56 = scmp.ne.s32.totalorder %s42, %s43
      %p57 = scmp.eq.s32.totalorder %s35, 1
      %p58 = por %p56, %p57
      %p60 = scmp.ne.s32.totalorder %s43, %s59
      %p61 = scmp.eq.s32.totalorder %s35, 0
      %p62 = por %p60, %p61
      %s63 = ssub.s32 %s29, %s36
      %p64 = scmp.eq.s32.totalorder %s63, 0
      %s66 = sadd.s32 %s65, 1
      %s67 = scalar_select %p64, %s65, %s66
      %p70 = pneg %p64
      %p71 = scmp.eq.s32.totalorder %s29, 1
      %p72 = por %p70, %p71
      %p73 = scmp.ne.s32.totalorder %s65, %s68
      %p74 = scmp.eq.s32.totalorder %s29, 0
      %p75 = por %p73, %p74
      %p76 = scmp.ne.s32.totalorder %s65, %s68
      %p77 = scmp.eq.s32.totalorder %s34, 1
      %p78 = por %p76, %p77
      %p79 = scmp.ne.s32.totalorder %s68, %s69
      %p80 = scmp.eq.s32.totalorder %s34, 0
      %p81 = por %p79, %p80
      %p82 = scmp.ne.s32.totalorder %s68, %s69
      %p83 = scmp.eq.s32.totalorder %s35, 1
      %p84 = por %p82, %p83
      %p86 = scmp.ne.s32.totalorder %s69, %s85
      %p87 = scmp.eq.s32.totalorder %s35, 0
      %p88 = por %p86, %p87
      %s89 = ssub.s32 %s29, %s36
      %p90 = scmp.eq.s32.totalorder %s89, 0
      %s92 = sadd.s32 %s91, 1
      %s93 = scalar_select %p90, %s91, %s92
      %p96 = pneg %p90
      %p97 = scmp.eq.s32.totalorder %s29, 1
      %p98 = por %p96, %p97
      %p99 = scmp.ne.s32.totalorder %s91, %s94
      %p100 = scmp.eq.s32.totalorder %s29, 0
      %p101 = por %p99, %p100
      %p102 = scmp.ne.s32.totalorder %s91, %s94
      %p103 = scmp.eq.s32.totalorder %s34, 1
      %p104 = por %p102, %p103
      %p105 = scmp.ne.s32.totalorder %s94, %s95
      %p106 = scmp.eq.s32.totalorder %s34, 0
      %p107 = por %p105, %p106
      %p108 = scmp.ne.s32.totalorder %s94, %s95
      %p109 = scmp.eq.s32.totalorder %s35, 1
      %p110 = por %p108, %p109
      %p112 = scmp.ne.s32.totalorder %s95, %s111
      %p113 = scmp.eq.s32.totalorder %s35, 0
      %p114 = por %p112, %p113
      %s115 = ssub.s32 %s29, %s36
      %p116 = scmp.eq.s32.totalorder %s115, 0
      %s118 = sadd.s32 %s117, 1
      %s119 = scalar_select %p116, %s117, %s118
      %p122 = pneg %p116
      %p123 = scmp.eq.s32.totalorder %s29, 1
      %p124 = por %p122, %p123
      %p125 = scmp.ne.s32.totalorder %s117, %s120
      %p126 = scmp.eq.s32.totalorder %s29, 0
      %p127 = por %p125, %p126
      %p128 = scmp.ne.s32.totalorder %s117, %s120
      %p129 = scmp.eq.s32.totalorder %s34, 1
      %p130 = por %p128, %p129
      %p131 = scmp.ne.s32.totalorder %s120, %s121
      %p132 = scmp.eq.s32.totalorder %s34, 0
      %p133 = por %p131, %p132
      %p134 = scmp.ne.s32.totalorder %s120, %s121
      %p135 = scmp.eq.s32.totalorder %s35, 1
      %p136 = por %p134, %p135
      %p138 = scmp.ne.s32.totalorder %s121, %s137
      %p139 = scmp.eq.s32.totalorder %s35, 0
      %p140 = por %p138, %p139
      %s141 = ssub.s32 %s29, %s36
      %p142 = scmp.eq.s32.totalorder %s141, 0
      %s144 = sadd.s32 %s143, 1
      %s145 = scalar_select %p142, %s143, %s144
      %p148 = pneg %p142
      %p149 = scmp.eq.s32.totalorder %s29, 1
      %p150 = por %p148, %p149
      %p151 = scmp.ne.s32.totalorder %s143, %s146
      %p152 = scmp.eq.s32.totalorder %s29, 0
      %p153 = por %p151, %p152
      %p154 = scmp.ne.s32.totalorder %s143, %s146
      %p155 = scmp.eq.s32.totalorder %s34, 1
      %p156 = por %p154, %p155
      %p157 = scmp.ne.s32.totalorder %s146, %s147
      %p158 = scmp.eq.s32.totalorder %s34, 0
      %p159 = por %p157, %p158
      %p160 = scmp.ne.s32.totalorder %s146, %s147
      %p161 = scmp.eq.s32.totalorder %s35, 1
      %p162 = por %p160, %p161
      %p164 = scmp.ne.s32.totalorder %s147, %s163
      %p165 = scmp.eq.s32.totalorder %s35, 0
      %p166 = por %p164, %p165
      %s168 = sadd.s32 %s167, 1
      %p171 = scmp.eq.s32.totalorder %s29, 1
      %p172 = scmp.ne.s32.totalorder %s167, %s169
      %p173 = scmp.eq.s32.totalorder %s29, 0
      %p174 = por %p172, %p173
      %p175 = scmp.ne.s32.totalorder %s167, %s169
      %p176 = scmp.eq.s32.totalorder %s34, 1
      %p177 = por %p175, %p176
      %p178 = scmp.ne.s32.totalorder %s169, %s170
      %p179 = scmp.eq.s32.totalorder %s34, 0
      %p180 = por %p178, %p179
      %p181 = scmp.ne.s32.totalorder %s169, %s170
      %p182 = scmp.eq.s32.totalorder %s35, 1
      %p183 = por %p181, %p182
      %p185 = scmp.ne.s32.totalorder %s170, %s184
      %p186 = scmp.eq.s32.totalorder %s35, 0
      %p187 = por %p185, %p186
      %s189 = sadd.s32 %s188, 1
      %p192 = scmp.eq.s32.totalorder %s29, 1
      %p193 = scmp.ne.s32.totalorder %s188, %s190
      %p194 = scmp.eq.s32.totalorder %s29, 0
      %p195 = por %p193, %p194
      %p196 = scmp.ne.s32.totalorder %s188, %s190
      %p197 = scmp.eq.s32.totalorder %s34, 1
      %p198 = por %p196, %p197
      %p199 = scmp.ne.s32.totalorder %s190, %s191
      %p200 = scmp.eq.s32.totalorder %s34, 0
      %p201 = por %p199, %p200
      %p202 = scmp.ne.s32.totalorder %s190, %s191
      %p203 = scmp.eq.s32.totalorder %s35, 1
      %p204 = por %p202, %p203
      %p206 = scmp.ne.s32.totalorder %s191, %s205
      %p207 = scmp.eq.s32.totalorder %s35, 0
      %p208 = por %p206, %p207
      %s210 = sadd.s32 %s209, 1
      %p213 = scmp.eq.s32.totalorder %s29, 1
      %p214 = scmp.ne.s32.totalorder %s209, %s211
      %p215 = scmp.eq.s32.totalorder %s29, 0
      %p216 = por %p214, %p215
      %p217 = scmp.ne.s32.totalorder %s209, %s211
      %p218 = scmp.eq.s32.totalorder %s34, 1
      %p219 = por %p217, %p218
      %p220 = scmp.ne.s32.totalorder %s211, %s212
      %p221 = scmp.eq.s32.totalorder %s34, 0
      %p222 = por %p220, %p221
      %p223 = scmp.ne.s32.totalorder %s211, %s212
      %p224 = scmp.eq.s32.totalorder %s35, 1
      %p225 = por %p223, %p224
      %p227 = scmp.ne.s32.totalorder %s212, %s226
      %p228 = scmp.eq.s32.totalorder %s35, 0
      %p229 = por %p227, %p228
      %s230 = ssub.s32 %s29, %s36
      %p231 = scmp.eq.s32.totalorder %s230, 0
      %s233 = sadd.s32 %s232, 1
      %s234 = scalar_select %p231, %s232, %s233
      %p237 = pneg %p231
      %p238 = scmp.eq.s32.totalorder %s29, 1
      %p239 = por %p237, %p238
      %p240 = scmp.ne.s32.totalorder %s232, %s235
      %p241 = scmp.eq.s32.totalorder %s29, 0
      %p242 = por %p240, %p241
      %p243 = scmp.ne.s32.totalorder %s232, %s235
      %p244 = scmp.eq.s32.totalorder %s34, 1
      %p245 = por %p243, %p244
      %p246 = scmp.ne.s32.totalorder %s235, %s236
      %p247 = scmp.eq.s32.totalorder %s34, 0
      %p248 = por %p246, %p247
      %p249 = scmp.ne.s32.totalorder %s235, %s236
      %p250 = scmp.eq.s32.totalorder %s35, 1
      %p251 = por %p249, %p250
      %p253 = scmp.ne.s32.totalorder %s236, %s252
      %p254 = scmp.eq.s32.totalorder %s35, 0
      %p255 = por %p253, %p254
      %s256 = ssub.s32 %s29, %s36
      %p257 = scmp.eq.s32.totalorder %s256, 0
      %s259 = sadd.s32 %s258, 1
      %s260 = scalar_select %p257, %s258, %s259
      %p263 = pneg %p257
      %p264 = scmp.eq.s32.totalorder %s29, 1
      %p265 = por %p263, %p264
      %p266 = scmp.ne.s32.totalorder %s258, %s261
      %p267 = scmp.eq.s32.totalorder %s29, 0
      %p268 = por %p266, %p267
      %p269 = scmp.ne.s32.totalorder %s258, %s261
      %p270 = scmp.eq.s32.totalorder %s34, 1
      %p271 = por %p269, %p270
      %p272 = scmp.ne.s32.totalorder %s261, %s262
      %p273 = scmp.eq.s32.totalorder %s34, 0
      %p274 = por %p272, %p273
      %p275 = scmp.ne.s32.totalorder %s261, %s262
      %p276 = scmp.eq.s32.totalorder %s35, 1
      %p277 = por %p275, %p276
      %p279 = scmp.ne.s32.totalorder %s262, %s278
      %p280 = scmp.eq.s32.totalorder %s35, 0
      %p281 = por %p279, %p280
      %s282 = ssub.s32 %s29, %s36
      %p283 = scmp.eq.s32.totalorder %s282, 0
      %s285 = sadd.s32 %s284, 1
      %s286 = scalar_select %p283, %s284, %s285
      %p289 = pneg %p283
      %p290 = scmp.eq.s32.totalorder %s29, 1
      %p291 = por %p289, %p290
      %p292 = scmp.ne.s32.totalorder %s284, %s287
      %p293 = scmp.eq.s32.totalorder %s29, 0
      %p294 = por %p292, %p293
      %p295 = scmp.ne.s32.totalorder %s284, %s287
      %p296 = scmp.eq.s32.totalorder %s34, 1
      %p297 = por %p295, %p296
      %p298 = scmp.ne.s32.totalorder %s287, %s288
      %p299 = scmp.eq.s32.totalorder %s34, 0
      %p300 = por %p298, %p299
      %p301 = scmp.ne.s32.totalorder %s287, %s288
      %p302 = scmp.eq.s32.totalorder %s35, 1
      %p303 = por %p301, %p302
      %p305 = scmp.ne.s32.totalorder %s288, %s304
      %p306 = scmp.eq.s32.totalorder %s35, 0
      %p307 = por %p305, %p306
      %p308 = scmp.le.s32.totalorder 1, %s29
      %p309 = scmp.lt.s32.totalorder %s29, 3
      %p310 = pnand %p308, %p309
      %p311 = pneg %p310
      // Predicated region
      $region9: #{tpu_custom_call.1} parent=5 // pred_check
        _
      $region10: #{tpu_custom_call.1} parent=5 // pred_check_branch
        %313 = sbr.rel (%p310) target = $region12
      $region11: #{tpu_custom_call.1} parent=5 // pred_region
        %s314 = ssub.s32 %s29, 1
        // Predicated region
        $region13: #{tpu_custom_call.1} parent=11 // pred_check
          %p315 = pneg %p180
        $region14: #{tpu_custom_call.1} parent=11 // pred_check_branch
          %317 = sbr.rel (%p315) target = $region16
        $region15: #{tpu_custom_call.1} parent=11 // pred_region
          %319 = vsyncadd [#allocation6], 0
          %s320 = sshll.u32 %s5, 4
          %s321 = int_to_ptr.hbm [resolvable:$true] %s320
          %s322 = sshll.u32 [#allocation7], 4
          %s323 = int_to_ptr.vmem [resolvable:$true] %s322
          %328 = dma.hbm_to_vmem [thread:$0]  %s321, 512, %s323, [#allocation6], 128, 128, 8
        $region16: #{tpu_custom_call.1} parent=11 // pred_fallthru
          _
        // Predicated region
        $region17: #{tpu_custom_call.1} parent=11 // pred_check
          %p329 = pneg %p201
        $region18: #{tpu_custom_call.1} parent=11 // pred_check_branch
          %331 = sbr.rel (%p329) target = $region20
        $region19: #{tpu_custom_call.1} parent=11 // pred_region
          _
        $region20: #{tpu_custom_call.1} parent=11 // pred_fallthru
          _
        // Predicated region
        $region21: #{tpu_custom_call.1} parent=11 // pred_check
          %p332 = pneg %p222
        $region22: #{tpu_custom_call.1} parent=11 // pred_check_branch
          %334 = sbr.rel (%p332) target = $region24
        $region23: #{tpu_custom_call.1} parent=11 // pred_region
          _
        $region24: #{tpu_custom_call.1} parent=11 // pred_fallthru
          _
      $region12: #{tpu_custom_call.1} parent=5 // pred_fallthru
        _
      %p335 = scmp.lt.s32.totalorder %s29, 2
      // Predicated region
      $region25: #{tpu_custom_call.1} parent=5 // pred_check
        %p336 = pneg %p335
      $region26: #{tpu_custom_call.1} parent=5 // pred_check_branch
        %338 = sbr.rel (%p336) target = $region28
      $region27: #{tpu_custom_call.1} parent=5 // pred_region
        // Predicated region
        $region29: #{tpu_custom_call.1} parent=27 // pred_check
          %p339 = pneg %p49
        $region30: #{tpu_custom_call.1} parent=27 // pred_check_branch
          %341 = sbr.rel (%p339) target = $region32
        $region31: #{tpu_custom_call.1} parent=27 // pred_region
          %s342 = smul.u32 2, %s29
          %p343 = scmp.lt.s32.totalorder %s342, 3
          %s344 = scalar_select %p343, %s342, 3
          %s345 = smul.addr %s344, 8
          %s346 = scalar_lea.vmem %s0, %s345
          %s347 = smul.u32 2, %s29
        $region32: #{tpu_custom_call.1} parent=27 // pred_fallthru
          _
        // Predicated region
        $region33: #{tpu_custom_call.1} parent=27 // pred_check
          %p348 = pneg %p75
        $region34: #{tpu_custom_call.1} parent=27 // pred_check_branch
          %350 = sbr.rel (%p348) target = $region36
        $region35: #{tpu_custom_call.1} parent=27 // pred_region
          %s351 = smul.u32 2, %s29
          %p352 = scmp.lt.s32.totalorder %s351, 3
          %s353 = scalar_select %p352, %s351, 3
          %s354 = scalar_lea.vmem %s1, %s353
          %s355 = smul.u32 2, %s29
        $region36: #{tpu_custom_call.1} parent=27 // pred_fallthru
          _
        // Predicated region
        $region37: #{tpu_custom_call.1} parent=27 // pred_check
          %p356 = pneg %p101
        $region38: #{tpu_custom_call.1} parent=27 // pred_check_branch
          %358 = sbr.rel (%p356) target = $region40
        $region39: #{tpu_custom_call.1} parent=27 // pred_region
          %s359 = sand.u32 %s91, 1
          %s360 = scalar_lea.sflag [#allocation3], %s359
          %s361 = sand.u32 %s91, 1
          %s362 = smul.addr %s361, 2
          %s363 = scalar_lea.vmem [#allocation2], %s362
          %s364 = smul.u32 2, %s29
          %366 = vsyncadd %s360, 0
          %s367 = scalar_lea.hbm %s2, %s364
          %s368 = sshll.u32 %s367, 4
          %s369 = int_to_ptr.hbm [resolvable:$true] %s368
          %s370 = sshll.u32 %s363, 4
          %s371 = int_to_ptr.vmem [resolvable:$true] %s370
          %376 = dma.hbm_to_vmem [thread:$0]  %s369, 32, %s371, %s360, 16, 16, 1
        $region40: #{tpu_custom_call.1} parent=27 // pred_fallthru
          _
        // Predicated region
        $region41: #{tpu_custom_call.1} parent=27 // pred_check
          %p377 = pneg %p127
        $region42: #{tpu_custom_call.1} parent=27 // pred_check_branch
          %379 = sbr.rel (%p377) target = $region44
        $region43: #{tpu_custom_call.1} parent=27 // pred_region
          %s380 = sand.u32 %s29, 1
          %s381 = scalar_lea.sflag [#allocation6], %s380
          %s382 = sand.u32 %s117, 1
          %s383 = smul.addr %s382, 2
          %s384 = scalar_lea.vmem [#allocation5], %s383
          %s385 = smul.u32 2, %s29
          %387 = vsyncadd %s381, 0
          %s388 = scalar_lea.hbm %s3, %s385
          %s389 = sshll.u32 %s388, 4
          %s390 = int_to_ptr.hbm [resolvable:$true] %s389
          %s391 = sshll.u32 %s384, 4
          %s392 = int_to_ptr.vmem [resolvable:$true] %s391
          %397 = dma.hbm_to_vmem [thread:$0]  %s390, 32, %s392, %s381, 16, 16, 1
        $region44: #{tpu_custom_call.1} parent=27 // pred_fallthru
          _
        // Predicated region
        $region45: #{tpu_custom_call.1} parent=27 // pred_check
          %p398 = pneg %p153
        $region46: #{tpu_custom_call.1} parent=27 // pred_check_branch
          %400 = sbr.rel (%p398) target = $region48
        $region47: #{tpu_custom_call.1} parent=27 // pred_region
          %s401 = smul.u32 2, %s29
          %p402 = scmp.lt.s32.totalorder %s401, 3
          %s403 = scalar_select %p402, %s401, 3
          %s404 = smul.addr %s403, 8
          %s405 = scalar_lea.vmem %s4, %s404
          %s406 = smul.u32 2, %s29
        $region48: #{tpu_custom_call.1} parent=27 // pred_fallthru
          _
      $region28: #{tpu_custom_call.1} parent=5 // pred_fallthru
        _
      %p407 = scmp.le.s32.totalorder 1, %s29
      %p408 = scmp.lt.s32.totalorder %s29, 3
      %p409 = pnand %p407, %p408
      %p410 = pneg %p409
      // Predicated region
      $region49: #{tpu_custom_call.1} parent=5 // pred_check
        _
      $region50: #{tpu_custom_call.1} parent=5 // pred_check_branch
        %412 = sbr.rel (%p409) target = $region52
      $region51: #{tpu_custom_call.1} parent=5 // pred_region
        %s413 = ssub.s32 %s29, 1
        %s414 = sand.u32 %s94, 1
        %s415 = scalar_lea.sflag [#allocation3], %s414
        %s416 = sand.u32 %s94, 1
        %s417 = smul.addr %s416, 2
        %s418 = scalar_lea.vmem [#allocation2], %s417
        // Predicated region
        $region53: #{tpu_custom_call.1} parent=51 // pred_check
          %p419 = pneg %p107
        $region54: #{tpu_custom_call.1} parent=51 // pred_check_branch
          %421 = sbr.rel (%p419) target = $region56
        $region55: #{tpu_custom_call.1} parent=51 // pred_region
          %423 = dma.done %s415, 32
        $region56: #{tpu_custom_call.1} parent=51 // pred_fallthru
          _
        %s424 = sand.u32 %s34, 1
        %s425 = scalar_lea.sflag [#allocation6], %s424
        %s426 = sand.u32 %s120, 1
        %s427 = smul.addr %s426, 2
        %s428 = scalar_lea.vmem [#allocation5], %s427
        // Predicated region
        $region57: #{tpu_custom_call.1} parent=51 // pred_check
          %p429 = pneg %p133
        $region58: #{tpu_custom_call.1} parent=51 // pred_check_branch
          %431 = sbr.rel (%p429) target = $region60
        $region59: #{tpu_custom_call.1} parent=51 // pred_region
          %433 = dma.done %s425, 32
        $region60: #{tpu_custom_call.1} parent=51 // pred_fallthru
          _
        // Predicated region
        $region61: #{tpu_custom_call.1} parent=51 // pred_check
          %p434 = pneg %p180
        $region62: #{tpu_custom_call.1} parent=51 // pred_check_branch
          %436 = sbr.rel (%p434) target = $region64
        $region63: #{tpu_custom_call.1} parent=51 // pred_region
          %438 = dma.done [#allocation6], 512
        $region64: #{tpu_custom_call.1} parent=51 // pred_fallthru
          _
        %s439 = smul.u32 2, %s34
        %p440 = scmp.lt.s32.totalorder %s439, 3
        %s441 = scalar_select %p440, %s439, 3
        %s442 = smul.addr %s441, 8
        %s443 = scalar_lea.vmem %s0, %s442
        %p444 = pneg %p55
        %p445 = pneg %p52
        %s446 = smul.u32 2, %s34
        %p447 = scmp.lt.s32.totalorder %s446, 3
        %s448 = scalar_select %p447, %s446, 3
        %s449 = scalar_lea.vmem %s1, %s448
        %p450 = pneg %p81
        %p451 = pneg %p78
        %s452 = sand.u32 %s94, 1
        %s453 = scalar_lea.sflag [#allocation3], %s452
        %s454 = sand.u32 %s94, 1
        %s455 = smul.addr %s454, 2
        %s456 = scalar_lea.vmem [#allocation2], %s455
        %p457 = pneg %p107
        %p458 = pneg %p104
        %s459 = sand.u32 %s34, 1
        %s460 = scalar_lea.sflag [#allocation6], %s459
        %s461 = sand.u32 %s120, 1
        %s462 = smul.addr %s461, 2
        %s463 = scalar_lea.vmem [#allocation5], %s462
        %p464 = pneg %p133
        %p465 = pneg %p130
        %s466 = smul.u32 2, %s34
        %p467 = scmp.lt.s32.totalorder %s466, 3
        %s468 = scalar_select %p467, %s466, 3
        %s469 = smul.addr %s468, 8
        %s470 = scalar_lea.vmem %s4, %s469
        %p471 = pneg %p159
        %p472 = pneg %p156
        %p473 = pneg %p180
        %p474 = pneg %p177
        %p475 = pneg %p201
        %p476 = pneg %p198
        %p477 = pneg %p222
        %p478 = pneg %p219
        %p479 = pneg %p248
        %p480 = pneg %p245
        %s481 = sand.u32 %s235, 1
        %s482 = scalar_lea.sflag [#allocation4], %s481
        %s483 = sand.u32 %s235, 1
        %s484 = smul.addr %s483, 2
        %s485 = scalar_lea.vmem [#allocation8], %s484
        %p486 = pneg %p274
        %p487 = pneg %p271
        %s488 = sand.u32 %s34, 1
        %s489 = scalar_lea.sflag [#allocation10], %s488
        %s490 = sand.u32 %s261, 1
        %s491 = smul.addr %s490, 2
        %s492 = scalar_lea.vmem [#allocation9], %s491
        %p493 = pneg %p300
        %p494 = pneg %p297
        %s495 = sand.u32 %s34, 1
        %s496 = scalar_lea.sflag [#allocation10], %s495
        %s497 = sand.u32 %s287, 1
        %s498 = smul.addr %s497, 2
        %s499 = scalar_lea.vmem [#allocation11], %s498
        %s500 = smul.u32 2, %s34
        %p501 = scmp.lt.s32.totalorder %s500, 3
        %s502 = scalar_select %p501, %s500, 3
        %s503 = smul.addr %s502, 8
        %s504 = scalar_lea.vmem %s0, %s503
        %s505 = smul.u32 2, %s34
        %s506 = smul.u32 2, %s34
        %p507 = scmp.lt.s32.totalorder %s506, 3
        %s508 = scalar_select %p507, %s506, 3
        %s509 = scalar_lea.vmem %s1, %s508
        %s510 = smul.u32 2, %s34
        %s511 = smul.u32 2, %s34
        %s512 = smul.u32 2, %s34
        %s513 = smul.u32 2, %s34
        %p514 = scmp.lt.s32.totalorder %s513, 3
        %s515 = scalar_select %p514, %s513, 3
        %s516 = smul.addr %s515, 8
        %s517 = scalar_lea.vmem %s4, %s516
        %s518 = smul.u32 2, %s34
        %s519 = smul.u32 2, %s34
        %s520 = smul.u32 2, %s34
        %s521 = smul.u32 2, %s34
        %v522 = vld [vmem:[%s504] sm:$0xff]
        %v523 = vld [vmem:[%s504 + $0x8] sm:$0xff]
        %v524 = vld [vmem:[#allocation7] sm:$0xff]
        %v525 = vld [vmem:[#allocation7 + $0x8] sm:$0xff]
        %v526 = vld [vmem:[#allocation7 + $0x10] sm:$0xff]
        %v527 = vld [vmem:[#allocation7 + $0x18] sm:$0xff]
        %vm528 = vcmask 261120
        %v530 = vsel %vm528, %v522, 0
        %v533 = vsel %vm528, %v523, 0
        %535 = vmatpush.msra.mxu0 0.0
        %536 = vmatpush.msra.mxu0 0.0
        %537 = vmatpush.msra.mxu0 0.0
        %538 = vmatpush.msra.mxu0 0.0
        %539 = vmatpush.msra.mxu0 0.0
        %540 = vmatpush.msra.mxu0 0.0
        %541 = vmatpush.msra.mxu0 0.0
        %542 = vmatpush.msra.mxu0 0.0
        %543 = vmatpush.msra.mxu0 0.0
        %544 = vmatpush.msra.mxu0 0.0
        %545 = vmatpush.msra.mxu0 0.0
        %546 = vmatpush.msra.mxu0 0.0
        %547 = vmatpush.msra.mxu0 %v527
        %548 = vmatpush.msra.mxu0 %v526
        %549 = vmatpush.msra.mxu0 %v525
        %550 = vmatpush.msra.mxu0 %v524
        %551 = vmatmul.f32.gmra.mxu0 %v530
        %v552 = vpop.f32.mrf.mxu0
        %v553 = vadd.f32 0.0, %v552
        %554 = vmatmul.f32.gmra.mxu0 %v533
        %v555 = vpop.f32.mrf.mxu0
        %v556 = vadd.f32 0.0, %v555
        %557 = vdwg.mxu0
        %v558 = vld [vmem:[%s509] sm:$0x1]
        %v559 = vld [vmem:[%s509 + $0x1] sm:$0x1]
        %v560 = vld [vmem:[%s517] sm:$0xff]
        %v561 = vld [vmem:[%s517 + $0x8] sm:$0xff]
        %v562 = vld [vmem:[%s6] sm:$0x1]
        %564 = vset.pattern.permute.xlu0 0
        %565 = vperm.xlu0 %564, %v560
        %v566 = vpop.permute.xlu0 %565
        %569 = vset.pattern.permute.xlu0 0
        %570 = vperm.xlu0 %569, %v561
        %v571 = vpop.permute.xlu0 %570
        %v574 = vperm.slane %v562, 0
        %v576 = vmul.f32 %v566, %v574
        %v577 = vmul.f32 %v571, %v574
        %v580 = vperm.slane %v558, 0
        %v581 = vperm.slane %v559, 0
        %v584 = vadd.f32 %v553, %v580
        %v585 = vadd.f32 %v556, %v581
        %v586 = vadd.f32 %v584, %v576
        %v587 = vadd.f32 %v585, %v577
        %v588 = vtanh.pop %v586
        %v589 = vtanh.pop %v587
        %v590 = vld [vmem:[%s7] sm:$0x1]
        %v592 = vsel %vm528, %v590, 0
        %v595 = vsel %vm528, %v588, 0
        %597 = vmatpush.xpose.msra.mxu0 0.0
        %598 = vmatpush.xpose.msra.mxu0 0.0
        %599 = vmatpush.xpose.msra.mxu0 0.0
        %600 = vmatpush.xpose.msra.mxu0 0.0
        %601 = vmatpush.xpose.msra.mxu0 0.0
        %602 = vmatpush.xpose.msra.mxu0 0.0
        %603 = vmatpush.xpose.msra.mxu0 0.0
        %604 = vmatpush.xpose.msra.mxu0 0.0
        %605 = vmatpush.xpose.msra.mxu0 0.0
        %606 = vmatpush.xpose.msra.mxu0 0.0
        %607 = vmatpush.xpose.msra.mxu0 0.0
        %608 = vmatpush.xpose.msra.mxu0 0.0
        %609 = vmatpush.xpose.msra.mxu0 0.0
        %610 = vmatpush.xpose.msra.mxu0 0.0
        %611 = vmatpush.xpose.msra.mxu0 0.0
        %612 = vmatpush.xpose.msra.mxu0 %v595
        %613 = vmatmul.f32.gmra.mxu0 %v592
        %v614 = vpop.f32.mrf.mxu0
        %v615 = vadd.f32 0.0, %v614
        %616 = vdwg.mxu0
        %v618 = vsel %vm528, %v589, 0
        %620 = vmatpush.xpose.msra.mxu0 0.0
        %621 = vmatpush.xpose.msra.mxu0 0.0
        %622 = vmatpush.xpose.msra.mxu0 0.0
        %623 = vmatpush.xpose.msra.mxu0 0.0
        %624 = vmatpush.xpose.msra.mxu0 0.0
        %625 = vmatpush.xpose.msra.mxu0 0.0
        %626 = vmatpush.xpose.msra.mxu0 0.0
        %627 = vmatpush.xpose.msra.mxu0 0.0
        %628 = vmatpush.xpose.msra.mxu0 0.0
        %629 = vmatpush.xpose.msra.mxu0 0.0
        %630 = vmatpush.xpose.msra.mxu0 0.0
        %631 = vmatpush.xpose.msra.mxu0 0.0
        %632 = vmatpush.xpose.msra.mxu0 0.0
        %633 = vmatpush.xpose.msra.mxu0 0.0
        %634 = vmatpush.xpose.msra.mxu0 0.0
        %635 = vmatpush.xpose.msra.mxu0 %v618
        %636 = vmatmul.f32.gmra.mxu0 %v592
        %v637 = vpop.f32.mrf.mxu0
        %v638 = vadd.f32 0.0, %v637
        %639 = vdwg.mxu0
        %v640 = vld [vmem:[%s418] sm:$0x1]
        %v641 = vld [vmem:[%s418 + $0x1] sm:$0x1]
        %v642 = vld [vmem:[%s428] sm:$0x1]
        %v643 = vld [vmem:[%s428 + $0x1] sm:$0x1]
        %vm644 = vcmask 57344
        %v645 = vsel %vm644, %v615, -inf
        %646 = vmax.xlane.f32.xlu0 %v645
        %v647 = vpop.xlane.xlu0 %646
        %v648 = vsel %vm644, %v638, -inf
        %649 = vmax.xlane.f32.xlu0 %v648
        %v650 = vpop.xlane.xlu0 %649
        %v651 = vsub.f32 %v615, %v647
        %v652 = vsub.f32 %v638, %v650
        %v653 = vmul.f32 %v651, 1.442695
        %v654 = vpow.pop %v653
        %v655 = vmul.f32 %v652, 1.442695
        %v656 = vpow.pop %v655
        %v657 = vmul.f32 %v654, %v640
        %v658 = vmul.f32 %v656, %v641
        %v659 = vsel %vm644, %v657, 0.0
        %660 = vadd.xlane.f32.xlu0 %v659
        %v661 = vpop.xlane.xlu0 %660
        %v662 = vsel %vm644, %v658, 0.0
        %663 = vadd.xlane.f32.xlu0 %v662
        %v664 = vpop.xlane.xlu0 %663
        %v665 = vmax.f32 %v661, 1e-30
        %v666 = vmax.f32 %v664, 1e-30
        %v667 = vrcp.pop %v665
        %v668 = vmul.f32 %v665, %v667
        %v669 = vsub.f32 1.0, %v668
        %v670 = vmul.f32 %v667, %v669
        %v671 = vadd.f32 %v667, %v670
        %vm672 = vweird.f32 %v665
        %vm673 = vweird.f32 %v667
        %vm674 = vmor %vm672, %vm673
        %v675 = vsel %vm674, %v667, %v671
        %v676 = vand.u32 2147483647, %v665
        %vm677 = vcmp.eq.f32.partialorder %v676, 8.507059e+37
        %v678 = vand.u32 %v665, 2147483648
        %v679 = vor.u32 1.1754944e-38, %v678
        %v680 = vsel %vm677, %v679, %v675
        %v681 = vrcp.pop %v666
        %v682 = vmul.f32 %v666, %v681
        %v683 = vsub.f32 1.0, %v682
        %v684 = vmul.f32 %v681, %v683
        %v685 = vadd.f32 %v681, %v684
        %vm686 = vweird.f32 %v666
        %vm687 = vweird.f32 %v681
        %vm688 = vmor %vm686, %vm687
        %v689 = vsel %vm688, %v681, %v685
        %v690 = vand.u32 2147483647, %v666
        %vm691 = vcmp.eq.f32.partialorder %v690, 8.507059e+37
        %v692 = vand.u32 %v666, 2147483648
        %v693 = vor.u32 1.1754944e-38, %v692
        %v694 = vsel %vm691, %v693, %v689
        %v695 = vmul.f32 %v657, %v680
        %v696 = vmul.f32 %v658, %v694
        %vm697 = vcmask 64512
        %v699 = vsel %vm697, %v695, 0
        %701 = vmatpush.msra.mxu0 0.0
        %702 = vmatpush.msra.mxu0 0.0
        %703 = vmatpush.msra.mxu0 0.0
        %704 = vmatpush.msra.mxu0 0.0
        %705 = vmatpush.msra.mxu0 0.0
        %706 = vmatpush.msra.mxu0 0.0
        %707 = vmatpush.msra.mxu0 0.0
        %708 = vmatpush.msra.mxu0 0.0
        %709 = vmatpush.msra.mxu0 0.0
        %710 = vmatpush.msra.mxu0 0.0
        %711 = vmatpush.msra.mxu0 0.0
        %712 = vmatpush.msra.mxu0 0.0
        %713 = vmatpush.msra.mxu0 0.0
        %714 = vmatpush.msra.mxu0 0.0
        %715 = vmatpush.msra.mxu0 0.0
        %716 = vmatpush.msra.mxu0 %v522
        %717 = vmatmul.f32.gmra.mxu0 %v699
        %v718 = vpop.f32.mrf.mxu0
        %v719 = vadd.f32 0.0, %v718
        %720 = vdwg.mxu0
        %v722 = vsel %vm697, %v696, 0
        %724 = vmatpush.msra.mxu0 0.0
        %725 = vmatpush.msra.mxu0 0.0
        %726 = vmatpush.msra.mxu0 0.0
        %727 = vmatpush.msra.mxu0 0.0
        %728 = vmatpush.msra.mxu0 0.0
        %729 = vmatpush.msra.mxu0 0.0
        %730 = vmatpush.msra.mxu0 0.0
        %731 = vmatpush.msra.mxu0 0.0
        %732 = vmatpush.msra.mxu0 0.0
        %733 = vmatpush.msra.mxu0 0.0
        %734 = vmatpush.msra.mxu0 0.0
        %735 = vmatpush.msra.mxu0 0.0
        %736 = vmatpush.msra.mxu0 0.0
        %737 = vmatpush.msra.mxu0 0.0
        %738 = vmatpush.msra.mxu0 0.0
        %739 = vmatpush.msra.mxu0 %v523
        %740 = vmatmul.f32.gmra.mxu0 %v722
        %v741 = vpop.f32.mrf.mxu0
        %v742 = vadd.f32 0.0, %v741
        %743 = vdwg.mxu0
        %vm744 = vcmask 253952
        %745 = vst.msk [vmem:[%s485] sm:$0x1] %vm744, %v719
        %746 = vst.msk [vmem:[%s485 + $0x1] sm:$0x1] %vm744, %v742
        %747 = vst.msk [vmem:[%s492] sm:$0x1] %vm644, %v695
        %748 = vst.msk [vmem:[%s492 + $0x1] sm:$0x1] %vm644, %v696
        %v749 = vadd.f32 %v642, %v695
        %v750 = vadd.f32 %v643, %v696
        %751 = vst.msk [vmem:[%s499] sm:$0x1] %vm644, %v749
        %752 = vst.msk [vmem:[%s499 + $0x1] sm:$0x1] %vm644, %v750
        %s753 = sand.u32 %s235, 1
        %s754 = scalar_lea.sflag [#allocation4], %s753
        %s755 = sand.u32 %s235, 1
        %s756 = smul.addr %s755, 2
        %s757 = scalar_lea.vmem [#allocation8], %s756
        %s758 = sand.u32 %s34, 1
        %s759 = scalar_lea.sflag [#allocation10], %s758
        %s760 = sand.u32 %s261, 1
        %s761 = smul.addr %s760, 2
        %s762 = scalar_lea.vmem [#allocation9], %s761
        %s763 = sand.u32 %s34, 1
        %s764 = scalar_lea.sflag [#allocation10], %s763
        %s765 = sand.u32 %s287, 1
        %s766 = smul.addr %s765, 2
        %s767 = scalar_lea.vmem [#allocation11], %s766
        // Predicated region
        $region65: #{tpu_custom_call.1} parent=51 // pred_check
          %p768 = pneg %p245
        $region66: #{tpu_custom_call.1} parent=51 // pred_check_branch
          %770 = sbr.rel (%p768) target = $region68
        $region67: #{tpu_custom_call.1} parent=51 // pred_region
          %s771 = smul.u32 2, %s34
          %773 = vsyncadd %s754, 0
          %s774 = scalar_lea.hbm %s8, %s771
          %s775 = sshll.u32 %s757, 4
          %s776 = int_to_ptr.vmem [resolvable:$true] %s775
          %s777 = sshll.u32 %s774, 4
          %s778 = int_to_ptr.hbm [resolvable:$true] %s777
          %783 = dma.vmem_to_hbm [thread:$0]  %s776, 32, %s778, %s754, 16, 16, 1
        $region68: #{tpu_custom_call.1} parent=51 // pred_fallthru
          _
        // Predicated region
        $region69: #{tpu_custom_call.1} parent=51 // pred_check
          %p784 = pneg %p271
        $region70: #{tpu_custom_call.1} parent=51 // pred_check_branch
          %786 = sbr.rel (%p784) target = $region72
        $region71: #{tpu_custom_call.1} parent=51 // pred_region
          %s787 = smul.u32 2, %s34
          %789 = vsyncadd %s759, 0
          %s790 = scalar_lea.hbm %s9, %s787
          %s791 = sshll.u32 %s762, 4
          %s792 = int_to_ptr.vmem [resolvable:$true] %s791
          %s793 = sshll.u32 %s790, 4
          %s794 = int_to_ptr.hbm [resolvable:$true] %s793
          %799 = dma.vmem_to_hbm [thread:$0]  %s792, 32, %s794, %s759, 16, 16, 1
        $region72: #{tpu_custom_call.1} parent=51 // pred_fallthru
          _
        // Predicated region
        $region73: #{tpu_custom_call.1} parent=51 // pred_check
          %p800 = pneg %p297
        $region74: #{tpu_custom_call.1} parent=51 // pred_check_branch
          %802 = sbr.rel (%p800) target = $region76
        $region75: #{tpu_custom_call.1} parent=51 // pred_region
          %s803 = smul.u32 2, %s34
          %805 = vsyncadd %s764, 0
          %s806 = scalar_lea.hbm %s10, %s803
          %s807 = sshll.u32 %s767, 4
          %s808 = int_to_ptr.vmem [resolvable:$true] %s807
          %s809 = sshll.u32 %s806, 4
          %s810 = int_to_ptr.hbm [resolvable:$true] %s809
          %815 = dma.vmem_to_hbm [thread:$0]  %s808, 32, %s810, %s764, 16, 16, 1
        $region76: #{tpu_custom_call.1} parent=51 // pred_fallthru
          _
      $region52: #{tpu_custom_call.1} parent=5 // pred_fallthru
        _
      %p816 = scmp.le.s32.totalorder 2, %s29
      // Predicated region
      $region77: #{tpu_custom_call.1} parent=5 // pred_check
        %p817 = pneg %p816
      $region78: #{tpu_custom_call.1} parent=5 // pred_check_branch
        %819 = sbr.rel (%p817) target = $region80
      $region79: #{tpu_custom_call.1} parent=5 // pred_region
        %s820 = ssub.s32 %s29, 2
        // Predicated region
        $region81: #{tpu_custom_call.1} parent=79 // pred_check
          %p821 = pneg %p251
        $region82: #{tpu_custom_call.1} parent=79 // pred_check_branch
          %823 = sbr.rel (%p821) target = $region84
        $region83: #{tpu_custom_call.1} parent=79 // pred_region
          %s824 = sand.u32 %s236, 1
          %s825 = scalar_lea.sflag [#allocation4], %s824
          %s826 = sand.u32 %s236, 1
          %s827 = smul.addr %s826, 2
          %s828 = scalar_lea.vmem [#allocation8], %s827
          %830 = dma.done %s825, 32
        $region84: #{tpu_custom_call.1} parent=79 // pred_fallthru
          _
        // Predicated region
        $region85: #{tpu_custom_call.1} parent=79 // pred_check
          %p831 = pneg %p277
        $region86: #{tpu_custom_call.1} parent=79 // pred_check_branch
          %833 = sbr.rel (%p831) target = $region88
        $region87: #{tpu_custom_call.1} parent=79 // pred_region
          %s834 = sand.u32 %s35, 1
          %s835 = scalar_lea.sflag [#allocation10], %s834
          %s836 = sand.u32 %s262, 1
          %s837 = smul.addr %s836, 2
          %s838 = scalar_lea.vmem [#allocation9], %s837
          %840 = dma.done %s835, 32
        $region88: #{tpu_custom_call.1} parent=79 // pred_fallthru
          _
        // Predicated region
        $region89: #{tpu_custom_call.1} parent=79 // pred_check
          %p841 = pneg %p303
        $region90: #{tpu_custom_call.1} parent=79 // pred_check_branch
          %843 = sbr.rel (%p841) target = $region92
        $region91: #{tpu_custom_call.1} parent=79 // pred_region
          %s844 = sand.u32 %s35, 1
          %s845 = scalar_lea.sflag [#allocation10], %s844
          %s846 = sand.u32 %s288, 1
          %s847 = smul.addr %s846, 2
          %s848 = scalar_lea.vmem [#allocation11], %s847
          %850 = dma.done %s845, 32
        $region92: #{tpu_custom_call.1} parent=79 // pred_fallthru
          _
      $region80: #{tpu_custom_call.1} parent=5 // pred_fallthru
        _
    $region6: #{tpu_custom_call.1} parent=1 // loop_footer
      %s33 = sadd.s32 1, %s29
    $region7: #{tpu_custom_call.1} parent=1 // loop_footer_branch
      %28 = sbr.rel target = $region3
    $region8: #{tpu_custom_call.1} parent=1 // loop_exit
      _
    %851 = vsyncpa [#allocation3], 1
    %s852 = scalar_lea.sflag [#allocation3], 1
    %853 = vsyncpa %s852, 1
    %854 = vsyncpa [#allocation6], 1
    %s855 = scalar_lea.sflag [#allocation6], 1
    %856 = vsyncpa %s855, 1
    %857 = vsyncpa [#allocation4], 1
    %s858 = scalar_lea.sflag [#allocation4], 1
    %859 = vsyncpa %s858, 1
    %860 = vsyncpa [#allocation10], 1
    %s861 = scalar_lea.sflag [#allocation10], 1
    %862 = vsyncpa %s861, 1

</llo_original>
